<compile_context>
chip_gen: v7x
topology: tpu7x:2x2x1
jax: 0.10.0
libtpu: 0.0.40
codegen_flags: <defaults>
</compile_context>

<pallas_src>
import functools

import jax
import jax.numpy as jnp
from jax.experimental import pallas as pl
from jax.experimental.pallas import tpu as pltpu


def _round_up(x, m):
    return ((x + m - 1) // m) * m


def _pad_to(x, shape):
    return jnp.pad(x, [(0, t - s) for s, t in zip(x.shape, shape)])


def _feat_pad(d):
    # v6e/v7x MXUs are 2x256^2: once a feature dim exceeds 128, pad to a
    # 256-multiple so the aggregation RHS feeds the full array; 128 otherwise
    # (v5e's 4x128^2 is already fully fed at 128).
    return _round_up(d, 128) if d <= 128 else _round_up(d, 256)


def _vmem_budget_bytes():
    """Per-generation VMEM budget with headroom under physical capacity."""
    try:
        cap = pltpu.get_tpu_info().vmem_capacity_bytes
    except Exception:
        cap = 64 * 1024 * 1024  # conservative default (v7x-sized)
    # v5e/v6e (128 MiB) -> 100 MiB budget; v7x (64 MiB) -> 44 MiB budget.
    return int(min(cap - 20 * 1024 * 1024, 100 * 1024 * 1024))


def _tile_plan(n):
    """Lane-aligned tile sizes that divide n_pad; big enough to amortize the
    ~0.35us per-grid-step overhead, and >=2 row tiles for v7x's 2 TCs when
    the graph allows it."""
    n_pad = _round_up(n, 128)

    def pick(want_two_tiles):
        for cand in (512, 256, 128):
            if cand > n_pad or n_pad % cand:
                continue
            if want_two_tiles and n_pad > 128 and n_pad // cand < 2:
                continue
            return cand
        return 128

    block_m = pick(True)    # row tiles: keep >=2 so ("parallel", ...) splits TCs
    block_k = pick(False)   # contraction tiles: as big as divides n_pad
    return n_pad, block_m, block_k


# ---------------------------------------------------------------------------
# Kernel 1: feature transform  XW = X @ W   (row-tiled, W resident, bf16 out)
# ---------------------------------------------------------------------------
def _xw_kernel(x_ref, w_ref, o_ref):
    o_ref[...] = jnp.dot(
        x_ref[...], w_ref[...], preferred_element_type=jnp.float32
    ).astype(o_ref.dtype)


def _feature_transform(x_p, w_p, *, block_m):
    n_pad, f_pad = x_p.shape
    h_pad = w_p.shape[1]
    return pl.pallas_call(
        _xw_kernel,
        out_shape=jax.ShapeDtypeStruct((n_pad, h_pad), jnp.bfloat16),
        grid=(n_pad // block_m,),
        in_specs=[
            pl.BlockSpec((block_m, f_pad), lambda i: (i, 0)),
            pl.BlockSpec((f_pad, h_pad), lambda i: (0, 0)),   # W resident
        ],
        out_specs=pl.BlockSpec((block_m, h_pad), lambda i: (i, 0)),
        compiler_params=pltpu.CompilerParams(
            dimension_semantics=("parallel",),
            vmem_limit_bytes=32 * 1024 * 1024,
        ),
        cost_estimate=pl.CostEstimate(
            flops=2 * n_pad * f_pad * h_pad,
            transcendentals=0,
            bytes_accessed=n_pad * f_pad * 2 + f_pad * h_pad * 2 + n_pad * h_pad * 2,
        ),
    )(x_p, w_p)


# ---------------------------------------------------------------------------
# Kernel 2: aggregation  out = act(A_hat @ XW + b)
#   grid = (row tile i [parallel], contraction tile k [arbitrary])
#   block_mask (scalar-prefetched, SMEM) skips all-zero A tiles.
# ---------------------------------------------------------------------------
def _agg_kernel(mask_ref, a_ref, xw_ref, b_ref, o_ref, *scratch,
                apply_relu, resident_xw, block_k):
    i = pl.program_id(0)
    k = pl.program_id(1)
    nk = pl.num_programs(1)
    # bf16 output -> f32 VMEM scratch; f32 output -> accumulate into o_ref.
    acc_ref = scratch[0] if scratch else o_ref

    @pl.when(k == 0)
    def _():
        acc_ref[...] = jnp.zeros_like(acc_ref)

    # Block-sparse skip: only aggregate A tiles that contain nonzeros.
    @pl.when(mask_ref[i * nk + k] != 0)
    def _():
        if resident_xw:
            start = pl.multiple_of(k * block_k, block_k)
            xw = xw_ref[pl.ds(start, block_k), :]
        else:
            xw = xw_ref[...]
        acc_ref[...] += jnp.dot(a_ref[...], xw, preferred_element_type=jnp.float32)

    @pl.when(k == nk - 1)
    def _():
        y = acc_ref[...] + b_ref[...]
        if apply_relu:
            y = jnp.maximum(y, 0.0)
        o_ref[...] = y.astype(o_ref.dtype)


def _aggregate(a_p, xw_p, b_p, block_mask, *, apply_relu, out_dtype,
               block_m, block_k, vmem_budget):
    n_pad = a_p.shape[0]
    h_pad = xw_p.shape[1]
    grid = (n_pad // block_m, n_pad // block_k)

    out_bytes = 2 if out_dtype == jnp.bfloat16 else 4
    use_scratch = out_dtype != jnp.float32

    def agg_vmem(resident):
        xw_b = 2 * n_pad * h_pad * 2 if resident else 2 * block_k * h_pad * 2
        return (2 * block_m * block_k * 2              # A tiles (double-buffered)
                + xw_b                                  # XW (resident or streamed)
                + 2 * h_pad * 4                         # bias
                + 2 * block_m * h_pad * out_bytes       # output tiles
                + (block_m * h_pad * 4 if use_scratch else 0))

    resident_xw = agg_vmem(True) <= vmem_budget
    need = agg_vmem(resident_xw)
    vmem_limit = int(min(need + (8 << 20), vmem_budget))

    if resident_xw:
        # Constant block index -> XW DMA'd once, only A tiles stream from HBM.
        xw_spec = pl.BlockSpec((n_pad, h_pad), lambda i, k, m: (0, 0))
    else:
        xw_spec = pl.BlockSpec((block_k, h_pad), lambda i, k, m: (k, 0))

    kernel = functools.partial(
        _agg_kernel, apply_relu=apply_relu, resident_xw=resident_xw,
        block_k=block_k)

    flops = 2 * n_pad * n_pad * h_pad
    bytes_accessed = (
        n_pad * n_pad * 2          # A_hat (bf16), read once
        + n_pad * h_pad * 2        # XW (bf16), read once
        + h_pad * 4                # bias
        + n_pad * h_pad * out_bytes
    )

    return pl.pallas_call(
        kernel,
        out_shape=jax.ShapeDtypeStruct((n_pad, h_pad), out_dtype),
        grid_spec=pltpu.PrefetchScalarGridSpec(
            num_scalar_prefetch=1,
            grid=grid,
            in_specs=[
                pl.BlockSpec((block_m, block_k), lambda i, k, m: (i, k)),  # A tile
                xw_spec,                                                   # XW
                pl.BlockSpec((1, h_pad), lambda i, k, m: (0, 0)),          # bias
            ],
            out_specs=pl.BlockSpec((block_m, h_pad), lambda i, k, m: (i, 0)),
            scratch_shapes=(
                [pltpu.VMEM((block_m, h_pad), jnp.float32)] if use_scratch else []
            ),
        ),
        compiler_params=pltpu.CompilerParams(
            dimension_semantics=("parallel", "arbitrary"),
            vmem_limit_bytes=vmem_limit,
        ),
        cost_estimate=pl.CostEstimate(
            flops=flops, transcendentals=0, bytes_accessed=bytes_accessed
        ),
    )(block_mask, a_p, xw_p, b_p)


# ---------------------------------------------------------------------------
# Generator forward
# ---------------------------------------------------------------------------
@jax.jit
def gcn_generator(a_hat, x, w1, b1, w2, b2):
    """a_hat: (N, N) normalized adjacency; x: (N, F_in); returns (N, F_out) f32."""
    n, f_in = x.shape
    hidden = w1.shape[1]
    f_out = w2.shape[1]

    n_pad, block_m, block_k = _tile_plan(n)
    f_in_pad = _feat_pad(f_in)
    h_pad = _feat_pad(hidden)
    f_out_pad = _feat_pad(f_out)
    budget = _vmem_budget_bytes()

    # bf16 operands (MXU-native), biases stay f32 (added to the f32 accumulator).
    a_p32 = _pad_to(a_hat.astype(jnp.float32), (n_pad, n_pad))
    a_p = a_p32.astype(jnp.bfloat16)
    x_p = _pad_to(x, (n_pad, f_in_pad)).astype(jnp.bfloat16)
    w1_p = _pad_to(w1, (f_in_pad, h_pad)).astype(jnp.bfloat16)
    b1_p = _pad_to(b1.reshape(1, -1), (1, h_pad)).astype(jnp.float32)
    w2_p = _pad_to(w2, (h_pad, f_out_pad)).astype(jnp.bfloat16)
    b2_p = _pad_to(b2.reshape(1, -1), (1, f_out_pad)).astype(jnp.float32)

    # Per-(i, k) block-nonzero table for A (scalar-prefetched into SMEM).
    gm, gk = n_pad // block_m, n_pad // block_k
    block_sums = jnp.abs(a_p32).reshape(gm, block_m, gk, block_k).sum(axis=(1, 3))
    block_mask = (block_sums > 0).astype(jnp.int32).reshape(-1)

    # TODO(synk): a fully fused two-layer kernel could reuse one A row-slab DMA
    # for both aggregations; kept as separate calls because layer-2 needs all
    # rows of h before it can aggregate.

    # Layer 1: XW1 once, then aggregation (+bias, ReLU), bf16 output.
    xw1 = _feature_transform(x_p, w1_p, block_m=block_m)
    h = _aggregate(a_p, xw1, b1_p, block_mask, apply_relu=True,
                   out_dtype=jnp.bfloat16, block_m=block_m, block_k=block_k,
                   vmem_budget=budget)

    # Layer 2: HW2 once, then aggregation (+bias), f32 output (acc in o_ref).
    xw2 = _feature_transform(h, w2_p, block_m=block_m)
    out = _aggregate(a_p, xw2, b2_p, block_mask, apply_relu=False,
                     out_dtype=jnp.float32, block_m=block_m, block_k=block_k,
                     vmem_budget=budget)
    return out[:n, :f_out]


def normalized_adjacency(edge_index, num_nodes):
    """Dense A_hat = D^{-1/2}(A + I)D^{-1/2} from a (2, E) edge_index.

    Mirrors PyG gcn_norm: duplicate edges accumulate weight, self-loops are
    only added for nodes that don't already have one.
    """
    src, dst = edge_index[0], edge_index[1]
    a = jnp.zeros((num_nodes, num_nodes), dtype=jnp.float32)
    # Message flows src -> dst (row = destination/aggregating node).
    a = a.at[dst, src].add(1.0)
    diag = jnp.diag(a)
    idx = jnp.arange(num_nodes)
    a = a.at[idx, idx].set(jnp.where(diag > 0, diag, 1.0))  # remaining self-loops
    deg = jnp.sum(a, axis=1)
    d_inv_sqrt = jnp.where(deg > 0, 1.0 / jnp.sqrt(deg), 0.0)
    return d_inv_sqrt[:, None] * a * d_inv_sqrt[None, :]


def init_generator_params(key, input_dim, output_dim):
    hidden = 2 * output_dim
    k1, k2 = jax.random.split(key)
    # Glorot-style deterministic init (shapes match GCNConv lin weights).
    w1 = jax.random.normal(k1, (input_dim, hidden), jnp.float32) * (
        1.0 / jnp.sqrt(input_dim)
    )
    b1 = jnp.zeros((1, hidden), jnp.float32)
    w2 = jax.random.normal(k2, (hidden, output_dim), jnp.float32) * (
        1.0 / jnp.sqrt(hidden)
    )
    b2 = jnp.zeros((1, output_dim), jnp.float32)
    return w1, b1, w2, b2


if __name__ == "__main__":
    key = jax.random.PRNGKey(0)
    k_x, k_p = jax.random.split(key)

    num_nodes = 8
    input_dim = 16
    output_dim = 8

    # Node features (N, F_in).
    x = jax.random.normal(k_x, (num_nodes, input_dim), jnp.float32)

    # Deterministic ring graph edges, (2, E) like PyG edge_index.
    idx = jnp.arange(num_nodes)
    edge_index = jnp.stack(
        [jnp.concatenate([idx, (idx + 1) % num_nodes]),
         jnp.concatenate([(idx + 1) % num_nodes, idx])],
        axis=0,
    )

    a_hat = normalized_adjacency(edge_index, num_nodes)
    w1, b1, w2, b2 = init_generator_params(k_p, input_dim, output_dim)

    out = gcn_generator(a_hat, x, w1, b1, w2, b2)
    jax.block_until_ready(out)

    # Reference check in plain f32 JAX (kernel uses bf16 operands -> loose tol).
    h_ref = jnp.maximum(a_hat @ (x @ w1) + b1, 0.0)
    out_ref = a_hat @ (h_ref @ w2) + b2
    assert out.shape == (num_nodes, output_dim)
    assert jnp.allclose(out, out_ref, atol=1e-1, rtol=5e-2), (
        "mismatch vs reference: max abs err = "
        f"{float(jnp.max(jnp.abs(out - out_ref)))}"
    )

    print("KERNEL_OK")
</pallas_src>

<mosaic_0001>
module attributes {stable_mosaic.version = 11 : i64} {
  func.func @_agg_kernel(%arg0: i32, %arg1: i32, %arg2: memref<1xi32, #tpu.memory_space<smem>>, %arg3: memref<128x128xbf16, #tpu.memory_space<vmem>>, %arg4: memref<128x128xbf16, #tpu.memory_space<vmem>>, %arg5: memref<1x128xf32, #tpu.memory_space<vmem>>, %arg6: memref<128x128xbf16, #tpu.memory_space<vmem>>, %arg7: memref<128x128xf32, #tpu.memory_space<vmem>>) attributes {dimension_semantics = [#tpu.dimension_semantics<parallel>, #tpu.dimension_semantics<arbitrary>], iteration_bounds = array<i64: 1, 1>, scalar_prefetch = 1 : i64, scratch_operands = 1 : i64, tpu.core_type = #tpu.core_type<tc>, window_params = [{transform_indices = @transform_0, window_bounds = array<i64: 128, 128>}, {pipeline_mode = #tpu.pipeline_mode<synchronous>, transform_indices = @transform_1, window_bounds = array<i64: 128, 128>}, {pipeline_mode = #tpu.pipeline_mode<synchronous>, transform_indices = @transform_2, window_bounds = array<i64: 1, 128>}, {transform_indices = @transform_3, window_bounds = array<i64: 128, 128>}]} {
    %c0_i32 = arith.constant 0 : i32
    %0 = arith.cmpi eq, %arg1, %c0_i32 : i32
    %1 = arith.extui %0 : i1 to i32
    %c0_i32_0 = arith.constant 0 : i32
    %2 = arith.cmpi ne, %1, %c0_i32_0 : i32
    scf.if %2 {
      %cst = arith.constant 0.000000e+00 : f32
      %13 = vector.broadcast %cst : f32 to vector<128x128xf32>
      %c0 = arith.constant 0 : index
      %c0_5 = arith.constant 0 : index
      %14 = vector.load %arg7[%c0, %c0_5] : memref<128x128xf32, #tpu.memory_space<vmem>>, vector<128x128xf32>
      tpu.vector_store %arg7[%c0, %c0_5], %13 {strides = array<i32>} : memref<128x128xf32, #tpu.memory_space<vmem>>, vector<128x128xf32>,
    } else {
    }
    %c1_i32 = arith.constant 1 : i32
    %3 = arith.muli %arg0, %c1_i32 : i32
    %4 = arith.addi %3, %arg1 : i32
    %5 = arith.index_cast %4 : i32 to index
    %6 = memref.load %arg2[%5] : memref<1xi32, #tpu.memory_space<smem>>
    %c0_i32_1 = arith.constant 0 : i32
    %7 = arith.cmpi ne, %6, %c0_i32_1 : i32
    %8 = arith.extui %7 : i1 to i32
    %c0_i32_2 = arith.constant 0 : i32
    %9 = arith.cmpi ne, %8, %c0_i32_2 : i32
    scf.if %9 {
      %c128_i32 = arith.constant 128 : i32
      %13 = arith.muli %arg1, %c128_i32 : i32
      %14 = tpu.assume_multiple %13, 128 : i32
      %15 = arith.index_cast %14 : i32 to index
      %c0 = arith.constant 0 : index
      %16 = vector.load %arg4[%15, %c0] : memref<128x128xbf16, #tpu.memory_space<vmem>>, vector<128x128xbf16>
      %c0_5 = arith.constant 0 : index
      %c0_6 = arith.constant 0 : index
      %17 = vector.load %arg7[%c0_5, %c0_6] : memref<128x128xf32, #tpu.memory_space<vmem>>, vector<128x128xf32>
      %c0_7 = arith.constant 0 : index
      %c0_8 = arith.constant 0 : index
      %18 = vector.load %arg3[%c0_7, %c0_8] : memref<128x128xbf16, #tpu.memory_space<vmem>>, vector<128x128xbf16>
      %cst = arith.constant dense<0.000000e+00> : vector<128x128xf32>
      %19 = tpu.matmul %18, %16, %cst {dimension_numbers = #tpu.dot_dimension_numbers<[1], [0], [0], [1], [0, 0, 1, 1], [], []>} : vector<128x128xbf16>, vector<128x128xbf16>, vector<128x128xf32> -> vector<128x128xf32>
      %20 = arith.addf %17, %19 : vector<128x128xf32>
      %c0_9 = arith.constant 0 : index
      %c0_10 = arith.constant 0 : index
      %21 = vector.load %arg7[%c0_9, %c0_10] : memref<128x128xf32, #tpu.memory_space<vmem>>, vector<128x128xf32>
      tpu.vector_store %arg7[%c0_9, %c0_10], %20 {strides = array<i32>} : memref<128x128xf32, #tpu.memory_space<vmem>>, vector<128x128xf32>,
    } else {
    }
    %c0_i32_3 = arith.constant 0 : i32
    %10 = arith.cmpi eq, %arg1, %c0_i32_3 : i32
    %11 = arith.extui %10 : i1 to i32
    %c0_i32_4 = arith.constant 0 : i32
    %12 = arith.cmpi ne, %11, %c0_i32_4 : i32
    scf.if %12 {
      %c0 = arith.constant 0 : index
      %c0_5 = arith.constant 0 : index
      %13 = vector.load %arg7[%c0, %c0_5] : memref<128x128xf32, #tpu.memory_space<vmem>>, vector<128x128xf32>
      %c0_6 = arith.constant 0 : index
      %c0_7 = arith.constant 0 : index
      %14 = vector.load %arg5[%c0_6, %c0_7] : memref<1x128xf32, #tpu.memory_space<vmem>>, vector<1x128xf32>
      %15 = vector.broadcast %14 : vector<1x128xf32> to vector<128x128xf32>
      %16 = arith.addf %13, %15 : vector<128x128xf32>
      %cst = arith.constant 0.000000e+00 : f32
      %17 = vector.broadcast %cst : f32 to vector<128x128xf32>
      %18 = arith.maximumf %16, %17 : vector<128x128xf32>
      %19 = arith.truncf %18 : vector<128x128xf32> to vector<128x128xbf16>
      %c0_8 = arith.constant 0 : index
      %c0_9 = arith.constant 0 : index
      %20 = vector.load %arg6[%c0_8, %c0_9] : memref<128x128xbf16, #tpu.memory_space<vmem>>, vector<128x128xbf16>
      tpu.vector_store %arg6[%c0_8, %c0_9], %19 {strides = array<i32>} : memref<128x128xbf16, #tpu.memory_space<vmem>>, vector<128x128xbf16>,
    } else {
    }
    return
  }
  func.func @transform_0(%arg0: i32, %arg1: i32, %arg2: memref<1xi32, #tpu.memory_space<smem>>) -> (i32, i32) {
    %c0_i32 = arith.constant 0 : i32
    return %arg0, %arg1 : i32, i32
  }
  func.func @transform_1(%arg0: i32, %arg1: i32, %arg2: memref<1xi32, #tpu.memory_space<smem>>) -> (i32, i32) {
    %c0_i32 = arith.constant 0 : i32
    %c0_i32_0 = arith.constant 0 : i32
    %c0_i32_1 = arith.constant 0 : i32
    return %c0_i32, %c0_i32_0 : i32, i32
  }
  func.func @transform_2(%arg0: i32, %arg1: i32, %arg2: memref<1xi32, #tpu.memory_space<smem>>) -> (i32, i32) {
    %c0_i32 = arith.constant 0 : i32
    %c0_i32_0 = arith.constant 0 : i32
    %c0_i32_1 = arith.constant 0 : i32
    return %c0_i32, %c0_i32_0 : i32, i32
  }
  func.func @transform_3(%arg0: i32, %arg1: i32, %arg2: memref<1xi32, #tpu.memory_space<smem>>) -> (i32, i32) {
    %c0_i32 = arith.constant 0 : i32
    %c0_i32_0 = arith.constant 0 : i32
    return %arg0, %c0_i32 : i32, i32
  }
}

module attributes {stable_mosaic.version = 11 : i64} {
  func.func @_xw_kernel(%arg0: i32, %arg1: memref<128x128xbf16, #tpu.memory_space<vmem>>, %arg2: memref<128x128xbf16, #tpu.memory_space<vmem>>, %arg3: memref<128x128xbf16, #tpu.memory_space<vmem>>) attributes {dimension_semantics = [#tpu.dimension_semantics<parallel>], iteration_bounds = array<i64: 1>, scalar_prefetch = 0 : i64, scratch_operands = 0 : i64, tpu.core_type = #tpu.core_type<tc>, window_params = [{transform_indices = @transform_0, window_bounds = array<i64: 128, 128>}, {pipeline_mode = #tpu.pipeline_mode<synchronous>, transform_indices = @transform_1, window_bounds = array<i64: 128, 128>}, {transform_indices = @transform_2, window_bounds = array<i64: 128, 128>}]} {
    %c0 = arith.constant 0 : index
    %c0_0 = arith.constant 0 : index
    %0 = vector.load %arg1[%c0, %c0_0] : memref<128x128xbf16, #tpu.memory_space<vmem>>, vector<128x128xbf16>
    %c0_1 = arith.constant 0 : index
    %c0_2 = arith.constant 0 : index
    %1 = vector.load %arg2[%c0_1, %c0_2] : memref<128x128xbf16, #tpu.memory_space<vmem>>, vector<128x128xbf16>
    %cst = arith.constant dense<0.000000e+00> : vector<128x128xf32>
    %2 = tpu.matmul %0, %1, %cst {dimension_numbers = #tpu.dot_dimension_numbers<[1], [0], [0], [1], [0, 0, 1, 1], [], []>} : vector<128x128xbf16>, vector<128x128xbf16>, vector<128x128xf32> -> vector<128x128xf32>
    %3 = arith.truncf %2 : vector<128x128xf32> to vector<128x128xbf16>
    %c0_3 = arith.constant 0 : index
    %c0_4 = arith.constant 0 : index
    %4 = vector.load %arg3[%c0_3, %c0_4] : memref<128x128xbf16, #tpu.memory_space<vmem>>, vector<128x128xbf16>
    tpu.vector_store %arg3[%c0_3, %c0_4], %3 {strides = array<i32>} : memref<128x128xbf16, #tpu.memory_space<vmem>>, vector<128x128xbf16>,
    return
  }
  func.func @transform_0(%arg0: i32) -> (i32, i32) {
    %c0_i32 = arith.constant 0 : i32
    %c0_i32_0 = arith.constant 0 : i32
    return %arg0, %c0_i32 : i32, i32
  }
  func.func @transform_1(%arg0: i32) -> (i32, i32) {
    %c0_i32 = arith.constant 0 : i32
    %c0_i32_0 = arith.constant 0 : i32
    %c0_i32_1 = arith.constant 0 : i32
    return %c0_i32, %c0_i32_0 : i32, i32
  }
  func.func @transform_2(%arg0: i32) -> (i32, i32) {
    %c0_i32 = arith.constant 0 : i32
    %c0_i32_0 = arith.constant 0 : i32
    return %arg0, %c0_i32 : i32, i32
  }
}

module attributes {stable_mosaic.version = 11 : i64} {
  func.func @_agg_kernel(%arg0: i32, %arg1: i32, %arg2: memref<1xi32, #tpu.memory_space<smem>>, %arg3: memref<128x128xbf16, #tpu.memory_space<vmem>>, %arg4: memref<128x128xbf16, #tpu.memory_space<vmem>>, %arg5: memref<1x128xf32, #tpu.memory_space<vmem>>, %arg6: memref<128x128xf32, #tpu.memory_space<vmem>>) attributes {dimension_semantics = [#tpu.dimension_semantics<parallel>, #tpu.dimension_semantics<arbitrary>], iteration_bounds = array<i64: 1, 1>, scalar_prefetch = 1 : i64, scratch_operands = 0 : i64, tpu.core_type = #tpu.core_type<tc>, window_params = [{transform_indices = @transform_0, window_bounds = array<i64: 128, 128>}, {pipeline_mode = #tpu.pipeline_mode<synchronous>, transform_indices = @transform_1, window_bounds = array<i64: 128, 128>}, {pipeline_mode = #tpu.pipeline_mode<synchronous>, transform_indices = @transform_2, window_bounds = array<i64: 1, 128>}, {transform_indices = @transform_3, window_bounds = array<i64: 128, 128>}]} {
    %c0_i32 = arith.constant 0 : i32
    %0 = arith.cmpi eq, %arg1, %c0_i32 : i32
    %1 = arith.extui %0 : i1 to i32
    %c0_i32_0 = arith.constant 0 : i32
    %2 = arith.cmpi ne, %1, %c0_i32_0 : i32
    scf.if %2 {
      %cst = arith.constant 0.000000e+00 : f32
      %13 = vector.broadcast %cst : f32 to vector<128x128xf32>
      %c0 = arith.constant 0 : index
      %c0_5 = arith.constant 0 : index
      %14 = vector.load %arg6[%c0, %c0_5] : memref<128x128xf32, #tpu.memory_space<vmem>>, vector<128x128xf32>
      tpu.vector_store %arg6[%c0, %c0_5], %13 {strides = array<i32>} : memref<128x128xf32, #tpu.memory_space<vmem>>, vector<128x128xf32>,
    } else {
    }
    %c1_i32 = arith.constant 1 : i32
    %3 = arith.muli %arg0, %c1_i32 : i32
    %4 = arith.addi %3, %arg1 : i32
    %5 = arith.index_cast %4 : i32 to index
    %6 = memref.load %arg2[%5] : memref<1xi32, #tpu.memory_space<smem>>
    %c0_i32_1 = arith.constant 0 : i32
    %7 = arith.cmpi ne, %6, %c0_i32_1 : i32
    %8 = arith.extui %7 : i1 to i32
    %c0_i32_2 = arith.constant 0 : i32
    %9 = arith.cmpi ne, %8, %c0_i32_2 : i32
    scf.if %9 {
      %c128_i32 = arith.constant 128 : i32
      %13 = arith.muli %arg1, %c128_i32 : i32
      %14 = tpu.assume_multiple %13, 128 : i32
      %15 = arith.index_cast %14 : i32 to index
      %c0 = arith.constant 0 : index
      %16 = vector.load %arg4[%15, %c0] : memref<128x128xbf16, #tpu.memory_space<vmem>>, vector<128x128xbf16>
      %c0_5 = arith.constant 0 : index
      %c0_6 = arith.constant 0 : index
      %17 = vector.load %arg6[%c0_5, %c0_6] : memref<128x128xf32, #tpu.memory_space<vmem>>, vector<128x128xf32>
      %c0_7 = arith.constant 0 : index
      %c0_8 = arith.constant 0 : index
      %18 = vector.load %arg3[%c0_7, %c0_8] : memref<128x128xbf16, #tpu.memory_space<vmem>>, vector<128x128xbf16>
      %cst = arith.constant dense<0.000000e+00> : vector<128x128xf32>
      %19 = tpu.matmul %18, %16, %cst {dimension_numbers = #tpu.dot_dimension_numbers<[1], [0], [0], [1], [0, 0, 1, 1], [], []>} : vector<128x128xbf16>, vector<128x128xbf16>, vector<128x128xf32> -> vector<128x128xf32>
      %20 = arith.addf %17, %19 : vector<128x128xf32>
      %c0_9 = arith.constant 0 : index
      %c0_10 = arith.constant 0 : index
      %21 = vector.load %arg6[%c0_9, %c0_10] : memref<128x128xf32, #tpu.memory_space<vmem>>, vector<128x128xf32>
      tpu.vector_store %arg6[%c0_9, %c0_10], %20 {strides = array<i32>} : memref<128x128xf32, #tpu.memory_space<vmem>>, vector<128x128xf32>,
    } else {
    }
    %c0_i32_3 = arith.constant 0 : i32
    %10 = arith.cmpi eq, %arg1, %c0_i32_3 : i32
    %11 = arith.extui %10 : i1 to i32
    %c0_i32_4 = arith.constant 0 : i32
    %12 = arith.cmpi ne, %11, %c0_i32_4 : i32
    scf.if %12 {
      %c0 = arith.constant 0 : index
      %c0_5 = arith.constant 0 : index
      %13 = vector.load %arg6[%c0, %c0_5] : memref<128x128xf32, #tpu.memory_space<vmem>>, vector<128x128xf32>
      %c0_6 = arith.constant 0 : index
      %c0_7 = arith.constant 0 : index
      %14 = vector.load %arg5[%c0_6, %c0_7] : memref<1x128xf32, #tpu.memory_space<vmem>>, vector<1x128xf32>
      %15 = vector.broadcast %14 : vector<1x128xf32> to vector<128x128xf32>
      %16 = arith.addf %13, %15 : vector<128x128xf32>
      %c0_8 = arith.constant 0 : index
      %c0_9 = arith.constant 0 : index
      %17 = vector.load %arg6[%c0_8, %c0_9] : memref<128x128xf32, #tpu.memory_space<vmem>>, vector<128x128xf32>
      tpu.vector_store %arg6[%c0_8, %c0_9], %16 {strides = array<i32>} : memref<128x128xf32, #tpu.memory_space<vmem>>, vector<128x128xf32>,
    } else {
    }
    return
  }
  func.func @transform_0(%arg0: i32, %arg1: i32, %arg2: memref<1xi32, #tpu.memory_space<smem>>) -> (i32, i32) {
    %c0_i32 = arith.constant 0 : i32
    return %arg0, %arg1 : i32, i32
  }
  func.func @transform_1(%arg0: i32, %arg1: i32, %arg2: memref<1xi32, #tpu.memory_space<smem>>) -> (i32, i32) {
    %c0_i32 = arith.constant 0 : i32
    %c0_i32_0 = arith.constant 0 : i32
    %c0_i32_1 = arith.constant 0 : i32
    return %c0_i32, %c0_i32_0 : i32, i32
  }
  func.func @transform_2(%arg0: i32, %arg1: i32, %arg2: memref<1xi32, #tpu.memory_space<smem>>) -> (i32, i32) {
    %c0_i32 = arith.constant 0 : i32
    %c0_i32_0 = arith.constant 0 : i32
    %c0_i32_1 = arith.constant 0 : i32
    return %c0_i32, %c0_i32_0 : i32, i32
  }
  func.func @transform_3(%arg0: i32, %arg1: i32, %arg2: memref<1xi32, #tpu.memory_space<smem>>) -> (i32, i32) {
    %c0_i32 = arith.constant 0 : i32
    %c0_i32_0 = arith.constant 0 : i32
    return %arg0, %c0_i32 : i32, i32
  }
}

</mosaic_0001>

<llo_original>
// kernel: gcn_generator.4
$region0: #{gcn_generator.4}
  #allocation0 [shape = 'u32[]', space=smem, size = 0x4, offset = 0x4, fixed_abs, tag = 'smem constant byte address 0x4 - core index']
  #allocation1 [shape = 'u32[144,128]{1,0:T(1,128)}', space=vmem, size = 0x12000, scoped, tag = 'internal scratch']
  %s0 = inlined_call_operand.vmem [shape: bf16[128,128], index: 0, kind: input, shape index: {}]
  %s1 = inlined_call_operand.vmem [shape: bf16[128,128], index: 1, kind: input, shape index: {}]
  %s2 = inlined_call_operand.vmem [shape: bf16[128,128], index: 2, kind: output, shape index: {}]
  %s3 = sld [smem:[#allocation0]]
  $region18: #{gcn_generator.4} parent=0
    _
  %s5 = ssub.s32 1, %s3
  %s6 = scalar_select 0, %s5, %s3
  // Predicated region
  $region2: #{gcn_generator.4} parent=0 // pred_check
    _
  $region3: #{gcn_generator.4} parent=0 // pred_check_branch
    %8 = sbr.rel (0) target = $region5
  $region4: #{gcn_generator.4} parent=0 // pred_region
    _
  $region5: #{gcn_generator.4} parent=0 // pred_fallthru
    _
  // Predicated region
  $region6: #{gcn_generator.4} parent=0 // pred_check
    _
  $region7: #{gcn_generator.4} parent=0 // pred_check_branch
    %10 = sbr.rel (0) target = $region9
  $region8: #{gcn_generator.4} parent=0 // pred_region
    _
  $region9: #{gcn_generator.4} parent=0 // pred_fallthru
    _
  %v12 = vld [vmem:[%s0] sm:$0xf]
  %v13 = vld [vmem:[%s0 + $0x4] sm:$0xf]
  %v14 = vld [vmem:[%s0 + $0x8] sm:$0xf]
  %v15 = vld [vmem:[%s0 + $0xc] sm:$0xf]
  %v16 = vld [vmem:[%s0 + $0x10] sm:$0xf]
  %v17 = vld [vmem:[%s0 + $0x14] sm:$0xf]
  %v18 = vld [vmem:[%s0 + $0x18] sm:$0xf]
  %v19 = vld [vmem:[%s0 + $0x1c] sm:$0xf]
  %v20 = vld [vmem:[%s0 + $0x20] sm:$0xf]
  %v21 = vld [vmem:[%s0 + $0x24] sm:$0xf]
  %v22 = vld [vmem:[%s0 + $0x28] sm:$0xf]
  %v23 = vld [vmem:[%s0 + $0x2c] sm:$0xf]
  %v24 = vld [vmem:[%s0 + $0x30] sm:$0xf]
  %v25 = vld [vmem:[%s0 + $0x34] sm:$0xf]
  %v26 = vld [vmem:[%s0 + $0x38] sm:$0xf]
  %v27 = vld [vmem:[%s0 + $0x3c] sm:$0xf]
  %v28 = vld [vmem:[%s1] sm:$0xf]
  %v29 = vld [vmem:[%s1 + $0x4] sm:$0xf]
  %v30 = vld [vmem:[%s1 + $0x8] sm:$0xf]
  %v31 = vld [vmem:[%s1 + $0xc] sm:$0xf]
  %v32 = vld [vmem:[%s1 + $0x10] sm:$0xf]
  %v33 = vld [vmem:[%s1 + $0x14] sm:$0xf]
  %v34 = vld [vmem:[%s1 + $0x18] sm:$0xf]
  %v35 = vld [vmem:[%s1 + $0x1c] sm:$0xf]
  %v36 = vld [vmem:[%s1 + $0x20] sm:$0xf]
  %v37 = vld [vmem:[%s1 + $0x24] sm:$0xf]
  %v38 = vld [vmem:[%s1 + $0x28] sm:$0xf]
  %v39 = vld [vmem:[%s1 + $0x2c] sm:$0xf]
  %v40 = vld [vmem:[%s1 + $0x30] sm:$0xf]
  %v41 = vld [vmem:[%s1 + $0x34] sm:$0xf]
  %v42 = vld [vmem:[%s1 + $0x38] sm:$0xf]
  %v43 = vld [vmem:[%s1 + $0x3c] sm:$0xf]
  %v60 = vunpack.c.l.b16 %v12
  %v61 = vunpack.c.l.b16 %v13
  %v62 = vunpack.c.l.b16 %v14
  %v63 = vunpack.c.l.b16 %v15
  %v64 = vunpack.c.l.b16 %v16
  %v65 = vunpack.c.l.b16 %v17
  %v66 = vunpack.c.l.b16 %v18
  %v67 = vunpack.c.l.b16 %v19
  %v68 = vunpack.c.l.b16 %v20
  %v69 = vunpack.c.l.b16 %v21
  %v70 = vunpack.c.l.b16 %v22
  %v71 = vunpack.c.l.b16 %v23
  %v72 = vunpack.c.l.b16 %v24
  %v73 = vunpack.c.l.b16 %v25
  %v74 = vunpack.c.l.b16 %v26
  %v75 = vunpack.c.l.b16 %v27
  %v76 = vpack.c.b16 %v61, %v60
  %v77 = vpack.c.b16 %v63, %v62
  %v78 = vpack.c.b16 %v65, %v64
  %v79 = vpack.c.b16 %v67, %v66
  %v80 = vpack.c.b16 %v69, %v68
  %v81 = vpack.c.b16 %v71, %v70
  %v82 = vpack.c.b16 %v73, %v72
  %v83 = vpack.c.b16 %v75, %v74
  %v108 = vunpack.c.l.b16 %v28
  %v109 = vunpack.c.l.b16 %v29
  %v110 = vunpack.c.l.b16 %v30
  %v111 = vunpack.c.l.b16 %v31
  %v112 = vunpack.c.l.b16 %v32
  %v113 = vunpack.c.l.b16 %v33
  %v114 = vunpack.c.l.b16 %v34
  %v115 = vunpack.c.l.b16 %v35
  %v116 = vunpack.c.l.b16 %v36
  %v117 = vunpack.c.l.b16 %v37
  %v118 = vunpack.c.l.b16 %v38
  %v119 = vunpack.c.l.b16 %v39
  %v120 = vunpack.c.l.b16 %v40
  %v121 = vunpack.c.l.b16 %v41
  %v122 = vunpack.c.l.b16 %v42
  %v123 = vunpack.c.l.b16 %v43
  %v124 = vpack.c.b16 %v109, %v108
  %v125 = vpack.c.b16 %v111, %v110
  %v126 = vpack.c.b16 %v113, %v112
  %v127 = vpack.c.b16 %v115, %v114
  %v128 = vpack.c.b16 %v117, %v116
  %v129 = vpack.c.b16 %v119, %v118
  %v130 = vpack.c.b16 %v121, %v120
  %v131 = vpack.c.b16 %v123, %v122
  %140 = vmatprep.subr.bf16.mxu0 0
  %141 = vmatpush1.bf16.msra.mxu0 %v124
  %142 = vmatprep.subr.bf16.mxu0 0
  %143 = vmatpush1.bf16.msra.mxu0 %v125
  %144 = vmatprep.subr.bf16.mxu0 0
  %145 = vmatpush1.bf16.msra.mxu0 %v126
  %146 = vmatprep.subr.bf16.mxu0 0
  %147 = vmatpush1.bf16.msra.mxu0 %v127
  %148 = vmatprep.subr.bf16.mxu0 0
  %149 = vmatpush1.bf16.msra.mxu0 %v128
  %150 = vmatprep.subr.bf16.mxu0 0
  %151 = vmatpush1.bf16.msra.mxu0 %v129
  %152 = vmatprep.subr.bf16.mxu0 0
  %153 = vmatpush1.bf16.msra.mxu0 %v130
  %154 = vmatprep.subr.bf16.mxu0 0
  %155 = vmatpush1.bf16.msra.mxu0 %v131
  %156 = vmatprep.subr.bf16.mxu0 0
  %157 = vmatpush1.bf16.msra.mxu0 0
  %158 = vmatprep.subr.bf16.mxu0 0
  %159 = vmatpush1.bf16.msra.mxu0 0
  %160 = vmatprep.subr.bf16.mxu0 0
  %161 = vmatpush1.bf16.msra.mxu0 0
  %162 = vmatprep.subr.bf16.mxu0 0
  %163 = vmatpush1.bf16.msra.mxu0 0
  %164 = vmatprep.subr.bf16.mxu0 0
  %165 = vmatpush1.bf16.msra.mxu0 0
  %166 = vmatprep.subr.bf16.mxu0 0
  %167 = vmatpush1.bf16.msra.mxu0 0
  %168 = vmatprep.subr.bf16.mxu0 0
  %169 = vmatpush1.bf16.msra.mxu0 0
  %170 = vmatprep.subr.bf16.mxu0 0
  %171 = vmatpush1.bf16.msra.mxu0 0
  %172 = vmatprep.mubr.bf16.mxu0 0
  %173 = vmatmul.mubr.bf16.gmra.mrb[0].mxu0 %v76
  %v174 = vpop.f32.mrb[0].mxu0
  %v175 = vadd.f32 0.0, %v174
  %v176 = vpop.f32.mrb[0].mxu0
  %v177 = vpop.f32.mrb[0].mxu0
  %v178 = vadd.f32 0.0, %v177
  %v179 = vpop.f32.mrb[0].mxu0
  %180 = vmatprep.mubr.bf16.mxu0 0
  %181 = vmatmul.mubr.bf16.gmra.mrb[0].mxu0 %v77
  %v182 = vpop.f32.mrb[0].mxu0
  %v183 = vadd.f32 0.0, %v182
  %v184 = vpop.f32.mrb[0].mxu0
  %v185 = vpop.f32.mrb[0].mxu0
  %v186 = vadd.f32 0.0, %v185
  %v187 = vpop.f32.mrb[0].mxu0
  %188 = vmatprep.mubr.bf16.mxu0 0
  %189 = vmatmul.mubr.bf16.gmra.mrb[0].mxu0 %v78
  %v190 = vpop.f32.mrb[0].mxu0
  %v191 = vadd.f32 0.0, %v190
  %v192 = vpop.f32.mrb[0].mxu0
  %v193 = vpop.f32.mrb[0].mxu0
  %v194 = vadd.f32 0.0, %v193
  %v195 = vpop.f32.mrb[0].mxu0
  %196 = vmatprep.mubr.bf16.mxu0 0
  %197 = vmatmul.mubr.bf16.gmra.mrb[0].mxu0 %v79
  %v198 = vpop.f32.mrb[0].mxu0
  %v199 = vadd.f32 0.0, %v198
  %v200 = vpop.f32.mrb[0].mxu0
  %v201 = vpop.f32.mrb[0].mxu0
  %v202 = vadd.f32 0.0, %v201
  %v203 = vpop.f32.mrb[0].mxu0
  %204 = vmatprep.mubr.bf16.mxu0 0
  %205 = vmatmul.mubr.bf16.gmra.mrb[0].mxu0 %v80
  %v206 = vpop.f32.mrb[0].mxu0
  %v207 = vadd.f32 0.0, %v206
  %v208 = vpop.f32.mrb[0].mxu0
  %v209 = vpop.f32.mrb[0].mxu0
  %v210 = vadd.f32 0.0, %v209
  %v211 = vpop.f32.mrb[0].mxu0
  %212 = vmatprep.mubr.bf16.mxu0 0
  %213 = vmatmul.mubr.bf16.gmra.mrb[0].mxu0 %v81
  %v214 = vpop.f32.mrb[0].mxu0
  %v215 = vadd.f32 0.0, %v214
  %v216 = vpop.f32.mrb[0].mxu0
  %v217 = vpop.f32.mrb[0].mxu0
  %v218 = vadd.f32 0.0, %v217
  %v219 = vpop.f32.mrb[0].mxu0
  %220 = vmatprep.mubr.bf16.mxu0 0
  %221 = vmatmul.mubr.bf16.gmra.mrb[0].mxu0 %v82
  %v222 = vpop.f32.mrb[0].mxu0
  %v223 = vadd.f32 0.0, %v222
  %v224 = vpop.f32.mrb[0].mxu0
  %v225 = vpop.f32.mrb[0].mxu0
  %v226 = vadd.f32 0.0, %v225
  %v227 = vpop.f32.mrb[0].mxu0
  %228 = vmatprep.mubr.bf16.mxu0 0
  %229 = vmatmul.mubr.bf16.gmra.mrb[0].mxu0 %v83
  %v230 = vpop.f32.mrb[0].mxu0
  %v231 = vadd.f32 0.0, %v230
  %v232 = vpop.f32.mrb[0].mxu0
  %v233 = vpop.f32.mrb[0].mxu0
  %v234 = vadd.f32 0.0, %v233
  %v235 = vpop.f32.mrb[0].mxu0
  %236 = vdwg.mxu0
  %v237 = vpack.c.bf16 %v178, %v175
  %v238 = vpack.c.bf16 %v186, %v183
  %v239 = vpack.c.bf16 %v194, %v191
  %v240 = vpack.c.bf16 %v202, %v199
  %v241 = vpack.c.bf16 %v210, %v207
  %v242 = vpack.c.bf16 %v218, %v215
  %v243 = vpack.c.bf16 %v226, %v223
  %v244 = vpack.c.bf16 %v234, %v231
  %v253 = vunpack.c.l.b16 %v237
  %v254 = vunpack.c.h.b16 %v237
  %v255 = vunpack.c.l.b16 %v238
  %v256 = vunpack.c.h.b16 %v238
  %v257 = vunpack.c.l.b16 %v239
  %v258 = vunpack.c.h.b16 %v239
  %v259 = vunpack.c.l.b16 %v240
  %v260 = vunpack.c.h.b16 %v240
  %v261 = vunpack.c.l.b16 %v241
  %v262 = vunpack.c.h.b16 %v241
  %v263 = vunpack.c.l.b16 %v242
  %v264 = vunpack.c.h.b16 %v242
  %v265 = vunpack.c.l.b16 %v243
  %v266 = vunpack.c.h.b16 %v243
  %v267 = vunpack.c.l.b16 %v244
  %v268 = vunpack.c.h.b16 %v244
  %v269 = vpack.c.b16 %v253, %v253
  %v270 = vpack.c.b16 %v254, %v254
  %v271 = vpack.c.b16 %v255, %v255
  %v272 = vpack.c.b16 %v256, %v256
  %v273 = vpack.c.b16 %v257, %v257
  %v274 = vpack.c.b16 %v258, %v258
  %v275 = vpack.c.b16 %v259, %v259
  %v276 = vpack.c.b16 %v260, %v260
  %v277 = vpack.c.b16 %v261, %v261
  %v278 = vpack.c.b16 %v262, %v262
  %v279 = vpack.c.b16 %v263, %v263
  %v280 = vpack.c.b16 %v264, %v264
  %v281 = vpack.c.b16 %v265, %v265
  %v282 = vpack.c.b16 %v266, %v266
  %v283 = vpack.c.b16 %v267, %v267
  %v284 = vpack.c.b16 %v268, %v268
  %301 = vst [vmem:[%s2] sm:$0xf] %v269
  %302 = vst [vmem:[%s2 + $0x4] sm:$0xf] %v270
  %303 = vst [vmem:[%s2 + $0x8] sm:$0xf] %v271
  %304 = vst [vmem:[%s2 + $0xc] sm:$0xf] %v272
  %305 = vst [vmem:[%s2 + $0x10] sm:$0xf] %v273
  %306 = vst [vmem:[%s2 + $0x14] sm:$0xf] %v274
  %307 = vst [vmem:[%s2 + $0x18] sm:$0xf] %v275
  %308 = vst [vmem:[%s2 + $0x1c] sm:$0xf] %v276
  %309 = vst [vmem:[%s2 + $0x20] sm:$0xf] %v277
  %310 = vst [vmem:[%s2 + $0x24] sm:$0xf] %v278
  %311 = vst [vmem:[%s2 + $0x28] sm:$0xf] %v279
  %312 = vst [vmem:[%s2 + $0x2c] sm:$0xf] %v280
  %313 = vst [vmem:[%s2 + $0x30] sm:$0xf] %v281
  %314 = vst [vmem:[%s2 + $0x34] sm:$0xf] %v282
  %315 = vst [vmem:[%s2 + $0x38] sm:$0xf] %v283
  %316 = vst [vmem:[%s2 + $0x3c] sm:$0xf] %v284
  // Predicated region
  $region10: #{gcn_generator.4} parent=0 // pred_check
    _
  $region11: #{gcn_generator.4} parent=0 // pred_check_branch
    %318 = sbr.rel (0) target = $region13
  $region12: #{gcn_generator.4} parent=0 // pred_region
    _
  $region13: #{gcn_generator.4} parent=0 // pred_fallthru
    _
  // Predicated region
  $region14: #{gcn_generator.4} parent=0 // pred_check
    _
  $region15: #{gcn_generator.4} parent=0 // pred_check_branch
    %320 = sbr.rel (0) target = $region17
  $region16: #{gcn_generator.4} parent=0 // pred_region
    _
  $region17: #{gcn_generator.4} parent=0 // pred_fallthru
    _

// kernel: gcn_generator.5
$region0: #{gcn_generator.5}
  #allocation0 [shape = 'u32[]', space=smem, size = 0x4, offset = 0x4, fixed_abs, tag = 'smem constant byte address 0x4 - core index']
  #allocation1 [shape = 'u32[144,128]{1,0:T(1,128)}', space=vmem, size = 0x12000, scoped, tag = 'internal scratch']
  #allocation2 [shape = 'f32[128,128]{1,0:T(8,128)}', space=vmem, size = 0x10000, scoped, tag = 'scratch operand']
  #allocation3 [shape = 's32[1]{0}', space=sflag, size = 0x4, scoped, tag = 'scoped memory for gcn_generator.5']
  #allocation4 [shape = 's32[1]{0:T(128)S(6)}', space=smem, size = 0x200, scoped, tag = 'prefetched SMEM operand 0']
  %s0 = inlined_call_operand.<no memory space> [shape: s32[1], index: 0, kind: input, shape index: {}]
  %s1 = inlined_call_operand.vmem [shape: bf16[128,128], index: 1, kind: input, shape index: {}]
  %s2 = inlined_call_operand.vmem [shape: bf16[128,128], index: 2, kind: input, shape index: {}]
  %s3 = inlined_call_operand.vmem [shape: f32[1,128], index: 3, kind: input, shape index: {}]
  %s4 = inlined_call_operand.vmem [shape: bf16[128,128], index: 4, kind: output, shape index: {}]
  %s5 = sld [smem:[#allocation0]]
  $region34: #{gcn_generator.5} parent=0
    _
  %s7 = ssub.s32 1, %s5
  %s8 = scalar_select 0, %s7, %s5
  %9 = sst [smem:[#allocation4]] %s0
  // Predicated region
  $region2: #{gcn_generator.5} parent=0 // pred_check
    _
  $region3: #{gcn_generator.5} parent=0 // pred_check_branch
    %11 = sbr.rel (0) target = $region5
  $region4: #{gcn_generator.5} parent=0 // pred_region
    _
  $region5: #{gcn_generator.5} parent=0 // pred_fallthru
    _
  // Predicated region
  $region6: #{gcn_generator.5} parent=0 // pred_check
    _
  $region7: #{gcn_generator.5} parent=0 // pred_check_branch
    %13 = sbr.rel (0) target = $region9
  $region8: #{gcn_generator.5} parent=0 // pred_region
    _
  $region9: #{gcn_generator.5} parent=0 // pred_fallthru
    _
  // Predicated region
  $region10: #{gcn_generator.5} parent=0 // pred_check
    _
  $region11: #{gcn_generator.5} parent=0 // pred_check_branch
    %15 = sbr.rel (0) target = $region13
  $region12: #{gcn_generator.5} parent=0 // pred_region
    _
  $region13: #{gcn_generator.5} parent=0 // pred_fallthru
    _
  %p17 = scmp.eq.s32.totalorder 0, 0
  // Predicated region
  $region14: #{gcn_generator.5} parent=0 // pred_check
    %p18 = pneg %p17
  $region15: #{gcn_generator.5} parent=0 // pred_check_branch
    %20 = sbr.rel (%p18) target = $region17
  $region16: #{gcn_generator.5} parent=0 // pred_region
    %21 = vst [vmem:[#allocation2] sm:$0xff] 0.0
    %22 = vst [vmem:[#allocation2 + $0x8] sm:$0xff] 0.0
    %23 = vst [vmem:[#allocation2 + $0x10] sm:$0xff] 0.0
    %24 = vst [vmem:[#allocation2 + $0x18] sm:$0xff] 0.0
    %25 = vst [vmem:[#allocation2 + $0x20] sm:$0xff] 0.0
    %26 = vst [vmem:[#allocation2 + $0x28] sm:$0xff] 0.0
    %27 = vst [vmem:[#allocation2 + $0x30] sm:$0xff] 0.0
    %28 = vst [vmem:[#allocation2 + $0x38] sm:$0xff] 0.0
    %29 = vst [vmem:[#allocation2 + $0x40] sm:$0xff] 0.0
    %30 = vst [vmem:[#allocation2 + $0x48] sm:$0xff] 0.0
    %31 = vst [vmem:[#allocation2 + $0x50] sm:$0xff] 0.0
    %32 = vst [vmem:[#allocation2 + $0x58] sm:$0xff] 0.0
    %33 = vst [vmem:[#allocation2 + $0x60] sm:$0xff] 0.0
    %34 = vst [vmem:[#allocation2 + $0x68] sm:$0xff] 0.0
    %35 = vst [vmem:[#allocation2 + $0x70] sm:$0xff] 0.0
    %36 = vst [vmem:[#allocation2 + $0x78] sm:$0xff] 0.0
  $region17: #{gcn_generator.5} parent=0 // pred_fallthru
    _
  %s37 = sadd.s32 0, 0
  %s38 = sld [smem:[#allocation4 + %s37]]
  %p39 = scmp.ne.s32.totalorder %s38, 0
  // Predicated region
  $region18: #{gcn_generator.5} parent=0 // pred_check
    %p40 = pneg %p39
  $region19: #{gcn_generator.5} parent=0 // pred_check_branch
    %42 = sbr.rel (%p40) target = $region21
  $region20: #{gcn_generator.5} parent=0 // pred_region
    %s43 = smul.u32 0, 128
    %s44 = sshra.s32 %s43, 3
    %s45 = sand.u32 %s43, 7
    %s46 = smul.addr %s44, 4
    %s47 = scalar_lea.vmem %s2, %s46
    %v48 = vld [vmem:[%s47] sm:$0xf]
    %v49 = vld [vmem:[%s47 + $0x4] sm:$0xf]
    %v50 = vld [vmem:[%s47 + $0x8] sm:$0xf]
    %v51 = vld [vmem:[%s47 + $0xc] sm:$0xf]
    %v52 = vld [vmem:[%s47 + $0x10] sm:$0xf]
    %v53 = vld [vmem:[%s47 + $0x14] sm:$0xf]
    %v54 = vld [vmem:[%s47 + $0x18] sm:$0xf]
    %v55 = vld [vmem:[%s47 + $0x1c] sm:$0xf]
    %v56 = vld [vmem:[%s47 + $0x20] sm:$0xf]
    %v57 = vld [vmem:[%s47 + $0x24] sm:$0xf]
    %v58 = vld [vmem:[%s47 + $0x28] sm:$0xf]
    %v59 = vld [vmem:[%s47 + $0x2c] sm:$0xf]
    %v60 = vld [vmem:[%s47 + $0x30] sm:$0xf]
    %v61 = vld [vmem:[%s47 + $0x34] sm:$0xf]
    %v62 = vld [vmem:[%s47 + $0x38] sm:$0xf]
    %v63 = vld [vmem:[%s47 + $0x3c] sm:$0xf]
    %v64 = vld [vmem:[#allocation2] sm:$0xff]
    %v65 = vld [vmem:[#allocation2 + $0x8] sm:$0xff]
    %v66 = vld [vmem:[#allocation2 + $0x10] sm:$0xff]
    %v67 = vld [vmem:[#allocation2 + $0x18] sm:$0xff]
    %v68 = vld [vmem:[#allocation2 + $0x20] sm:$0xff]
    %v69 = vld [vmem:[#allocation2 + $0x28] sm:$0xff]
    %v70 = vld [vmem:[#allocation2 + $0x30] sm:$0xff]
    %v71 = vld [vmem:[#allocation2 + $0x38] sm:$0xff]
    %v72 = vld [vmem:[#allocation2 + $0x40] sm:$0xff]
    %v73 = vld [vmem:[#allocation2 + $0x48] sm:$0xff]
    %v74 = vld [vmem:[#allocation2 + $0x50] sm:$0xff]
    %v75 = vld [vmem:[#allocation2 + $0x58] sm:$0xff]
    %v76 = vld [vmem:[#allocation2 + $0x60] sm:$0xff]
    %v77 = vld [vmem:[#allocation2 + $0x68] sm:$0xff]
    %v78 = vld [vmem:[#allocation2 + $0x70] sm:$0xff]
    %v79 = vld [vmem:[#allocation2 + $0x78] sm:$0xff]
    %v80 = vld [vmem:[%s1] sm:$0xf]
    %v81 = vld [vmem:[%s1 + $0x4] sm:$0xf]
    %v82 = vld [vmem:[%s1 + $0x8] sm:$0xf]
    %v83 = vld [vmem:[%s1 + $0xc] sm:$0xf]
    %v84 = vld [vmem:[%s1 + $0x10] sm:$0xf]
    %v85 = vld [vmem:[%s1 + $0x14] sm:$0xf]
    %v86 = vld [vmem:[%s1 + $0x18] sm:$0xf]
    %v87 = vld [vmem:[%s1 + $0x1c] sm:$0xf]
    %v88 = vld [vmem:[%s1 + $0x20] sm:$0xf]
    %v89 = vld [vmem:[%s1 + $0x24] sm:$0xf]
    %v90 = vld [vmem:[%s1 + $0x28] sm:$0xf]
    %v91 = vld [vmem:[%s1 + $0x2c] sm:$0xf]
    %v92 = vld [vmem:[%s1 + $0x30] sm:$0xf]
    %v93 = vld [vmem:[%s1 + $0x34] sm:$0xf]
    %v94 = vld [vmem:[%s1 + $0x38] sm:$0xf]
    %v95 = vld [vmem:[%s1 + $0x3c] sm:$0xf]
    %v112 = vunpack.c.l.b16 %v80
    %v113 = vunpack.c.l.b16 %v81
    %v114 = vunpack.c.l.b16 %v82
    %v115 = vunpack.c.l.b16 %v83
    %v116 = vunpack.c.l.b16 %v84
    %v117 = vunpack.c.l.b16 %v85
    %v118 = vunpack.c.l.b16 %v86
    %v119 = vunpack.c.l.b16 %v87
    %v120 = vunpack.c.l.b16 %v88
    %v121 = vunpack.c.l.b16 %v89
    %v122 = vunpack.c.l.b16 %v90
    %v123 = vunpack.c.l.b16 %v91
    %v124 = vunpack.c.l.b16 %v92
    %v125 = vunpack.c.l.b16 %v93
    %v126 = vunpack.c.l.b16 %v94
    %v127 = vunpack.c.l.b16 %v95
    %v128 = vpack.c.b16 %v113, %v112
    %v129 = vpack.c.b16 %v115, %v114
    %v130 = vpack.c.b16 %v117, %v116
    %v131 = vpack.c.b16 %v119, %v118
    %v132 = vpack.c.b16 %v121, %v120
    %v133 = vpack.c.b16 %v123, %v122
    %v134 = vpack.c.b16 %v125, %v124
    %v135 = vpack.c.b16 %v127, %v126
    %v160 = vunpack.c.l.b16 %v48
    %v161 = vunpack.c.l.b16 %v49
    %v162 = vunpack.c.l.b16 %v50
    %v163 = vunpack.c.l.b16 %v51
    %v164 = vunpack.c.l.b16 %v52
    %v165 = vunpack.c.l.b16 %v53
    %v166 = vunpack.c.l.b16 %v54
    %v167 = vunpack.c.l.b16 %v55
    %v168 = vunpack.c.l.b16 %v56
    %v169 = vunpack.c.l.b16 %v57
    %v170 = vunpack.c.l.b16 %v58
    %v171 = vunpack.c.l.b16 %v59
    %v172 = vunpack.c.l.b16 %v60
    %v173 = vunpack.c.l.b16 %v61
    %v174 = vunpack.c.l.b16 %v62
    %v175 = vunpack.c.l.b16 %v63
    %v176 = vpack.c.b16 %v161, %v160
    %v177 = vpack.c.b16 %v163, %v162
    %v178 = vpack.c.b16 %v165, %v164
    %v179 = vpack.c.b16 %v167, %v166
    %v180 = vpack.c.b16 %v169, %v168
    %v181 = vpack.c.b16 %v171, %v170
    %v182 = vpack.c.b16 %v173, %v172
    %v183 = vpack.c.b16 %v175, %v174
    %192 = vmatprep.subr.bf16.mxu0 0
    %193 = vmatpush1.bf16.msra.mxu0 %v176
    %194 = vmatprep.subr.bf16.mxu0 0
    %195 = vmatpush1.bf16.msra.mxu0 %v177
    %196 = vmatprep.subr.bf16.mxu0 0
    %197 = vmatpush1.bf16.msra.mxu0 %v178
    %198 = vmatprep.subr.bf16.mxu0 0
    %199 = vmatpush1.bf16.msra.mxu0 %v179
    %200 = vmatprep.subr.bf16.mxu0 0
    %201 = vmatpush1.bf16.msra.mxu0 %v180
    %202 = vmatprep.subr.bf16.mxu0 0
    %203 = vmatpush1.bf16.msra.mxu0 %v181
    %204 = vmatprep.subr.bf16.mxu0 0
    %205 = vmatpush1.bf16.msra.mxu0 %v182
    %206 = vmatprep.subr.bf16.mxu0 0
    %207 = vmatpush1.bf16.msra.mxu0 %v183
    %208 = vmatprep.subr.bf16.mxu0 0
    %209 = vmatpush1.bf16.msra.mxu0 0
    %210 = vmatprep.subr.bf16.mxu0 0
    %211 = vmatpush1.bf16.msra.mxu0 0
    %212 = vmatprep.subr.bf16.mxu0 0
    %213 = vmatpush1.bf16.msra.mxu0 0
    %214 = vmatprep.subr.bf16.mxu0 0
    %215 = vmatpush1.bf16.msra.mxu0 0
    %216 = vmatprep.subr.bf16.mxu0 0
    %217 = vmatpush1.bf16.msra.mxu0 0
    %218 = vmatprep.subr.bf16.mxu0 0
    %219 = vmatpush1.bf16.msra.mxu0 0
    %220 = vmatprep.subr.bf16.mxu0 0
    %221 = vmatpush1.bf16.msra.mxu0 0
    %222 = vmatprep.subr.bf16.mxu0 0
    %223 = vmatpush1.bf16.msra.mxu0 0
    %224 = vmatprep.mubr.bf16.mxu0 0
    %225 = vmatmul.mubr.bf16.gmra.mrb[0].mxu0 %v128
    %v226 = vpop.f32.mrb[0].mxu0
    %v227 = vadd.f32 0.0, %v226
    %v228 = vpop.f32.mrb[0].mxu0
    %v229 = vpop.f32.mrb[0].mxu0
    %v230 = vadd.f32 0.0, %v229
    %v231 = vpop.f32.mrb[0].mxu0
    %232 = vmatprep.mubr.bf16.mxu0 0
    %233 = vmatmul.mubr.bf16.gmra.mrb[0].mxu0 %v129
    %v234 = vpop.f32.mrb[0].mxu0
    %v235 = vadd.f32 0.0, %v234
    %v236 = vpop.f32.mrb[0].mxu0
    %v237 = vpop.f32.mrb[0].mxu0
    %v238 = vadd.f32 0.0, %v237
    %v239 = vpop.f32.mrb[0].mxu0
    %240 = vmatprep.mubr.bf16.mxu0 0
    %241 = vmatmul.mubr.bf16.gmra.mrb[0].mxu0 %v130
    %v242 = vpop.f32.mrb[0].mxu0
    %v243 = vadd.f32 0.0, %v242
    %v244 = vpop.f32.mrb[0].mxu0
    %v245 = vpop.f32.mrb[0].mxu0
    %v246 = vadd.f32 0.0, %v245
    %v247 = vpop.f32.mrb[0].mxu0
    %248 = vmatprep.mubr.bf16.mxu0 0
    %249 = vmatmul.mubr.bf16.gmra.mrb[0].mxu0 %v131
    %v250 = vpop.f32.mrb[0].mxu0
    %v251 = vadd.f32 0.0, %v250
    %v252 = vpop.f32.mrb[0].mxu0
    %v253 = vpop.f32.mrb[0].mxu0
    %v254 = vadd.f32 0.0, %v253
    %v255 = vpop.f32.mrb[0].mxu0
    %256 = vmatprep.mubr.bf16.mxu0 0
    %257 = vmatmul.mubr.bf16.gmra.mrb[0].mxu0 %v132
    %v258 = vpop.f32.mrb[0].mxu0
    %v259 = vadd.f32 0.0, %v258
    %v260 = vpop.f32.mrb[0].mxu0
    %v261 = vpop.f32.mrb[0].mxu0
    %v262 = vadd.f32 0.0, %v261
    %v263 = vpop.f32.mrb[0].mxu0
    %264 = vmatprep.mubr.bf16.mxu0 0
    %265 = vmatmul.mubr.bf16.gmra.mrb[0].mxu0 %v133
    %v266 = vpop.f32.mrb[0].mxu0
    %v267 = vadd.f32 0.0, %v266
    %v268 = vpop.f32.mrb[0].mxu0
    %v269 = vpop.f32.mrb[0].mxu0
    %v270 = vadd.f32 0.0, %v269
    %v271 = vpop.f32.mrb[0].mxu0
    %272 = vmatprep.mubr.bf16.mxu0 0
    %273 = vmatmul.mubr.bf16.gmra.mrb[0].mxu0 %v134
    %v274 = vpop.f32.mrb[0].mxu0
    %v275 = vadd.f32 0.0, %v274
    %v276 = vpop.f32.mrb[0].mxu0
    %v277 = vpop.f32.mrb[0].mxu0
    %v278 = vadd.f32 0.0, %v277
    %v279 = vpop.f32.mrb[0].mxu0
    %280 = vmatprep.mubr.bf16.mxu0 0
    %281 = vmatmul.mubr.bf16.gmra.mrb[0].mxu0 %v135
    %v282 = vpop.f32.mrb[0].mxu0
    %v283 = vadd.f32 0.0, %v282
    %v284 = vpop.f32.mrb[0].mxu0
    %v285 = vpop.f32.mrb[0].mxu0
    %v286 = vadd.f32 0.0, %v285
    %v287 = vpop.f32.mrb[0].mxu0
    %288 = vdwg.mxu0
    %v289 = vadd.f32 %v64, %v227
    %v290 = vadd.f32 %v65, %v230
    %v291 = vadd.f32 %v66, %v235
    %v292 = vadd.f32 %v67, %v238
    %v293 = vadd.f32 %v68, %v243
    %v294 = vadd.f32 %v69, %v246
    %v295 = vadd.f32 %v70, %v251
    %v296 = vadd.f32 %v71, %v254
    %v297 = vadd.f32 %v72, %v259
    %v298 = vadd.f32 %v73, %v262
    %v299 = vadd.f32 %v74, %v267
    %v300 = vadd.f32 %v75, %v270
    %v301 = vadd.f32 %v76, %v275
    %v302 = vadd.f32 %v77, %v278
    %v303 = vadd.f32 %v78, %v283
    %v304 = vadd.f32 %v79, %v286
    %305 = vst [vmem:[#allocation2] sm:$0xff] %v289
    %306 = vst [vmem:[#allocation2 + $0x8] sm:$0xff] %v290
    %307 = vst [vmem:[#allocation2 + $0x10] sm:$0xff] %v291
    %308 = vst [vmem:[#allocation2 + $0x18] sm:$0xff] %v292
    %309 = vst [vmem:[#allocation2 + $0x20] sm:$0xff] %v293
    %310 = vst [vmem:[#allocation2 + $0x28] sm:$0xff] %v294
    %311 = vst [vmem:[#allocation2 + $0x30] sm:$0xff] %v295
    %312 = vst [vmem:[#allocation2 + $0x38] sm:$0xff] %v296
    %313 = vst [vmem:[#allocation2 + $0x40] sm:$0xff] %v297
    %314 = vst [vmem:[#allocation2 + $0x48] sm:$0xff] %v298
    %315 = vst [vmem:[#allocation2 + $0x50] sm:$0xff] %v299
    %316 = vst [vmem:[#allocation2 + $0x58] sm:$0xff] %v300
    %317 = vst [vmem:[#allocation2 + $0x60] sm:$0xff] %v301
    %318 = vst [vmem:[#allocation2 + $0x68] sm:$0xff] %v302
    %319 = vst [vmem:[#allocation2 + $0x70] sm:$0xff] %v303
    %320 = vst [vmem:[#allocation2 + $0x78] sm:$0xff] %v304
  $region21: #{gcn_generator.5} parent=0 // pred_fallthru
    _
  // Predicated region
  $region22: #{gcn_generator.5} parent=0 // pred_check
    %p321 = pneg %p17
  $region23: #{gcn_generator.5} parent=0 // pred_check_branch
    %323 = sbr.rel (%p321) target = $region25
  $region24: #{gcn_generator.5} parent=0 // pred_region
    %v324 = vld [vmem:[#allocation2] sm:$0xff]
    %v325 = vld [vmem:[#allocation2 + $0x8] sm:$0xff]
    %v326 = vld [vmem:[#allocation2 + $0x10] sm:$0xff]
    %v327 = vld [vmem:[#allocation2 + $0x18] sm:$0xff]
    %v328 = vld [vmem:[#allocation2 + $0x20] sm:$0xff]
    %v329 = vld [vmem:[#allocation2 + $0x28] sm:$0xff]
    %v330 = vld [vmem:[#allocation2 + $0x30] sm:$0xff]
    %v331 = vld [vmem:[#allocation2 + $0x38] sm:$0xff]
    %v332 = vld [vmem:[#allocation2 + $0x40] sm:$0xff]
    %v333 = vld [vmem:[#allocation2 + $0x48] sm:$0xff]
    %v334 = vld [vmem:[#allocation2 + $0x50] sm:$0xff]
    %v335 = vld [vmem:[#allocation2 + $0x58] sm:$0xff]
    %v336 = vld [vmem:[#allocation2 + $0x60] sm:$0xff]
    %v337 = vld [vmem:[#allocation2 + $0x68] sm:$0xff]
    %v338 = vld [vmem:[#allocation2 + $0x70] sm:$0xff]
    %v339 = vld [vmem:[#allocation2 + $0x78] sm:$0xff]
    %v340 = vld [vmem:[%s3] sm:$0x1]
    %v342 = vlaneseq
    %v343 = vshrl.u32 %v342, 7
    %v344 = vsub.s32 0, %v343
    %v345 = vrot.slane %v340, %v344
    %v347 = vadd.f32 %v324, %v345
    %v348 = vadd.f32 %v325, %v345
    %v349 = vadd.f32 %v326, %v345
    %v350 = vadd.f32 %v327, %v345
    %v351 = vadd.f32 %v328, %v345
    %v352 = vadd.f32 %v329, %v345
    %v353 = vadd.f32 %v330, %v345
    %v354 = vadd.f32 %v331, %v345
    %v355 = vadd.f32 %v332, %v345
    %v356 = vadd.f32 %v333, %v345
    %v357 = vadd.f32 %v334, %v345
    %v358 = vadd.f32 %v335, %v345
    %v359 = vadd.f32 %v336, %v345
    %v360 = vadd.f32 %v337, %v345
    %v361 = vadd.f32 %v338, %v345
    %v362 = vadd.f32 %v339, %v345
    %v363 = vmax.f32 %v347, 0.0
    %v364 = vmax.f32 %v348, 0.0
    %v365 = vmax.f32 %v349, 0.0
    %v366 = vmax.f32 %v350, 0.0
    %v367 = vmax.f32 %v351, 0.0
    %v368 = vmax.f32 %v352, 0.0
    %v369 = vmax.f32 %v353, 0.0
    %v370 = vmax.f32 %v354, 0.0
    %v371 = vmax.f32 %v355, 0.0
    %v372 = vmax.f32 %v356, 0.0
    %v373 = vmax.f32 %v357, 0.0
    %v374 = vmax.f32 %v358, 0.0
    %v375 = vmax.f32 %v359, 0.0
    %v376 = vmax.f32 %v360, 0.0
    %v377 = vmax.f32 %v361, 0.0
    %v378 = vmax.f32 %v362, 0.0
    %v379 = vpack.c.bf16 %v364, %v363
    %v380 = vpack.c.bf16 %v366, %v365
    %v381 = vpack.c.bf16 %v368, %v367
    %v382 = vpack.c.bf16 %v370, %v369
    %v383 = vpack.c.bf16 %v372, %v371
    %v384 = vpack.c.bf16 %v374, %v373
    %v385 = vpack.c.bf16 %v376, %v375
    %v386 = vpack.c.bf16 %v378, %v377
    %v395 = vunpack.c.l.b16 %v379
    %v396 = vunpack.c.h.b16 %v379
    %v397 = vunpack.c.l.b16 %v380
    %v398 = vunpack.c.h.b16 %v380
    %v399 = vunpack.c.l.b16 %v381
    %v400 = vunpack.c.h.b16 %v381
    %v401 = vunpack.c.l.b16 %v382
    %v402 = vunpack.c.h.b16 %v382
    %v403 = vunpack.c.l.b16 %v383
    %v404 = vunpack.c.h.b16 %v383
    %v405 = vunpack.c.l.b16 %v384
    %v406 = vunpack.c.h.b16 %v384
    %v407 = vunpack.c.l.b16 %v385
    %v408 = vunpack.c.h.b16 %v385
    %v409 = vunpack.c.l.b16 %v386
    %v410 = vunpack.c.h.b16 %v386
    %v411 = vpack.c.b16 %v395, %v395
    %v412 = vpack.c.b16 %v396, %v396
    %v413 = vpack.c.b16 %v397, %v397
    %v414 = vpack.c.b16 %v398, %v398
    %v415 = vpack.c.b16 %v399, %v399
    %v416 = vpack.c.b16 %v400, %v400
    %v417 = vpack.c.b16 %v401, %v401
    %v418 = vpack.c.b16 %v402, %v402
    %v419 = vpack.c.b16 %v403, %v403
    %v420 = vpack.c.b16 %v404, %v404
    %v421 = vpack.c.b16 %v405, %v405
    %v422 = vpack.c.b16 %v406, %v406
    %v423 = vpack.c.b16 %v407, %v407
    %v424 = vpack.c.b16 %v408, %v408
    %v425 = vpack.c.b16 %v409, %v409
    %v426 = vpack.c.b16 %v410, %v410
    %443 = vst [vmem:[%s4] sm:$0xf] %v411
    %444 = vst [vmem:[%s4 + $0x4] sm:$0xf] %v412
    %445 = vst [vmem:[%s4 + $0x8] sm:$0xf] %v413
    %446 = vst [vmem:[%s4 + $0xc] sm:$0xf] %v414
    %447 = vst [vmem:[%s4 + $0x10] sm:$0xf] %v415
    %448 = vst [vmem:[%s4 + $0x14] sm:$0xf] %v416
    %449 = vst [vmem:[%s4 + $0x18] sm:$0xf] %v417
    %450 = vst [vmem:[%s4 + $0x1c] sm:$0xf] %v418
    %451 = vst [vmem:[%s4 + $0x20] sm:$0xf] %v419
    %452 = vst [vmem:[%s4 + $0x24] sm:$0xf] %v420
    %453 = vst [vmem:[%s4 + $0x28] sm:$0xf] %v421
    %454 = vst [vmem:[%s4 + $0x2c] sm:$0xf] %v422
    %455 = vst [vmem:[%s4 + $0x30] sm:$0xf] %v423
    %456 = vst [vmem:[%s4 + $0x34] sm:$0xf] %v424
    %457 = vst [vmem:[%s4 + $0x38] sm:$0xf] %v425
    %458 = vst [vmem:[%s4 + $0x3c] sm:$0xf] %v426
  $region25: #{gcn_generator.5} parent=0 // pred_fallthru
    _
  // Predicated region
  $region26: #{gcn_generator.5} parent=0 // pred_check
    _
  $region27: #{gcn_generator.5} parent=0 // pred_check_branch
    %460 = sbr.rel (0) target = $region29
  $region28: #{gcn_generator.5} parent=0 // pred_region
    _
  $region29: #{gcn_generator.5} parent=0 // pred_fallthru
    _
  // Predicated region
  $region30: #{gcn_generator.5} parent=0 // pred_check
    _
  $region31: #{gcn_generator.5} parent=0 // pred_check_branch
    %462 = sbr.rel (0) target = $region33
  $region32: #{gcn_generator.5} parent=0 // pred_region
    _
  $region33: #{gcn_generator.5} parent=0 // pred_fallthru
    _

// kernel: gcn_generator.7
$region0: #{gcn_generator.7}
  #allocation0 [shape = 'u32[]', space=smem, size = 0x4, offset = 0x4, fixed_abs, tag = 'smem constant byte address 0x4 - core index']
  #allocation1 [shape = 'u32[144,128]{1,0:T(1,128)}', space=vmem, size = 0x12000, scoped, tag = 'internal scratch']
  #allocation2 [shape = 's32[1]{0}', space=sflag, size = 0x4, scoped, tag = 'scoped memory for gcn_generator.7']
  #allocation3 [shape = 's32[1]{0:T(128)S(6)}', space=smem, size = 0x200, scoped, tag = 'prefetched SMEM operand 0']
  %s0 = inlined_call_operand.<no memory space> [shape: s32[1], index: 0, kind: input, shape index: {}]
  %s1 = inlined_call_operand.vmem [shape: bf16[128,128], index: 1, kind: input, shape index: {}]
  %s2 = inlined_call_operand.vmem [shape: bf16[128,128], index: 2, kind: input, shape index: {}]
  %s3 = inlined_call_operand.vmem [shape: f32[1,128], index: 3, kind: input, shape index: {}]
  %s4 = inlined_call_operand.vmem [shape: f32[128,128], index: 4, kind: output, shape index: {}]
  %s5 = sld [smem:[#allocation0]]
  $region34: #{gcn_generator.7} parent=0
    _
  %s7 = ssub.s32 1, %s5
  %s8 = scalar_select 0, %s7, %s5
  %9 = sst [smem:[#allocation3]] %s0
  // Predicated region
  $region2: #{gcn_generator.7} parent=0 // pred_check
    _
  $region3: #{gcn_generator.7} parent=0 // pred_check_branch
    %11 = sbr.rel (0) target = $region5
  $region4: #{gcn_generator.7} parent=0 // pred_region
    _
  $region5: #{gcn_generator.7} parent=0 // pred_fallthru
    _
  // Predicated region
  $region6: #{gcn_generator.7} parent=0 // pred_check
    _
  $region7: #{gcn_generator.7} parent=0 // pred_check_branch
    %13 = sbr.rel (0) target = $region9
  $region8: #{gcn_generator.7} parent=0 // pred_region
    _
  $region9: #{gcn_generator.7} parent=0 // pred_fallthru
    _
  // Predicated region
  $region10: #{gcn_generator.7} parent=0 // pred_check
    _
  $region11: #{gcn_generator.7} parent=0 // pred_check_branch
    %15 = sbr.rel (0) target = $region13
  $region12: #{gcn_generator.7} parent=0 // pred_region
    _
  $region13: #{gcn_generator.7} parent=0 // pred_fallthru
    _
  %p17 = scmp.eq.s32.totalorder 0, 0
  // Predicated region
  $region14: #{gcn_generator.7} parent=0 // pred_check
    %p18 = pneg %p17
  $region15: #{gcn_generator.7} parent=0 // pred_check_branch
    %20 = sbr.rel (%p18) target = $region17
  $region16: #{gcn_generator.7} parent=0 // pred_region
    %21 = vst [vmem:[%s4] sm:$0xff] 0.0
    %22 = vst [vmem:[%s4 + $0x8] sm:$0xff] 0.0
    %23 = vst [vmem:[%s4 + $0x10] sm:$0xff] 0.0
    %24 = vst [vmem:[%s4 + $0x18] sm:$0xff] 0.0
    %25 = vst [vmem:[%s4 + $0x20] sm:$0xff] 0.0
    %26 = vst [vmem:[%s4 + $0x28] sm:$0xff] 0.0
    %27 = vst [vmem:[%s4 + $0x30] sm:$0xff] 0.0
    %28 = vst [vmem:[%s4 + $0x38] sm:$0xff] 0.0
    %29 = vst [vmem:[%s4 + $0x40] sm:$0xff] 0.0
    %30 = vst [vmem:[%s4 + $0x48] sm:$0xff] 0.0
    %31 = vst [vmem:[%s4 + $0x50] sm:$0xff] 0.0
    %32 = vst [vmem:[%s4 + $0x58] sm:$0xff] 0.0
    %33 = vst [vmem:[%s4 + $0x60] sm:$0xff] 0.0
    %34 = vst [vmem:[%s4 + $0x68] sm:$0xff] 0.0
    %35 = vst [vmem:[%s4 + $0x70] sm:$0xff] 0.0
    %36 = vst [vmem:[%s4 + $0x78] sm:$0xff] 0.0
  $region17: #{gcn_generator.7} parent=0 // pred_fallthru
    _
  %s37 = sadd.s32 0, 0
  %s38 = sld [smem:[#allocation3 + %s37]]
  %p39 = scmp.ne.s32.totalorder %s38, 0
  // Predicated region
  $region18: #{gcn_generator.7} parent=0 // pred_check
    %p40 = pneg %p39
  $region19: #{gcn_generator.7} parent=0 // pred_check_branch
    %42 = sbr.rel (%p40) target = $region21
  $region20: #{gcn_generator.7} parent=0 // pred_region
    %s43 = smul.u32 0, 128
    %s44 = sshra.s32 %s43, 3
    %s45 = sand.u32 %s43, 7
    %s46 = smul.addr %s44, 4
    %s47 = scalar_lea.vmem %s2, %s46
    %v48 = vld [vmem:[%s47] sm:$0xf]
    %v49 = vld [vmem:[%s47 + $0x4] sm:$0xf]
    %v50 = vld [vmem:[%s47 + $0x8] sm:$0xf]
    %v51 = vld [vmem:[%s47 + $0xc] sm:$0xf]
    %v52 = vld [vmem:[%s47 + $0x10] sm:$0xf]
    %v53 = vld [vmem:[%s47 + $0x14] sm:$0xf]
    %v54 = vld [vmem:[%s47 + $0x18] sm:$0xf]
    %v55 = vld [vmem:[%s47 + $0x1c] sm:$0xf]
    %v56 = vld [vmem:[%s47 + $0x20] sm:$0xf]
    %v57 = vld [vmem:[%s47 + $0x24] sm:$0xf]
    %v58 = vld [vmem:[%s47 + $0x28] sm:$0xf]
    %v59 = vld [vmem:[%s47 + $0x2c] sm:$0xf]
    %v60 = vld [vmem:[%s47 + $0x30] sm:$0xf]
    %v61 = vld [vmem:[%s47 + $0x34] sm:$0xf]
    %v62 = vld [vmem:[%s47 + $0x38] sm:$0xf]
    %v63 = vld [vmem:[%s47 + $0x3c] sm:$0xf]
    %v64 = vld [vmem:[%s4] sm:$0xff]
    %v65 = vld [vmem:[%s4 + $0x8] sm:$0xff]
    %v66 = vld [vmem:[%s4 + $0x10] sm:$0xff]
    %v67 = vld [vmem:[%s4 + $0x18] sm:$0xff]
    %v68 = vld [vmem:[%s4 + $0x20] sm:$0xff]
    %v69 = vld [vmem:[%s4 + $0x28] sm:$0xff]
    %v70 = vld [vmem:[%s4 + $0x30] sm:$0xff]
    %v71 = vld [vmem:[%s4 + $0x38] sm:$0xff]
    %v72 = vld [vmem:[%s4 + $0x40] sm:$0xff]
    %v73 = vld [vmem:[%s4 + $0x48] sm:$0xff]
    %v74 = vld [vmem:[%s4 + $0x50] sm:$0xff]
    %v75 = vld [vmem:[%s4 + $0x58] sm:$0xff]
    %v76 = vld [vmem:[%s4 + $0x60] sm:$0xff]
    %v77 = vld [vmem:[%s4 + $0x68] sm:$0xff]
    %v78 = vld [vmem:[%s4 + $0x70] sm:$0xff]
    %v79 = vld [vmem:[%s4 + $0x78] sm:$0xff]
    %v80 = vld [vmem:[%s1] sm:$0xf]
    %v81 = vld [vmem:[%s1 + $0x4] sm:$0xf]
    %v82 = vld [vmem:[%s1 + $0x8] sm:$0xf]
    %v83 = vld [vmem:[%s1 + $0xc] sm:$0xf]
    %v84 = vld [vmem:[%s1 + $0x10] sm:$0xf]
    %v85 = vld [vmem:[%s1 + $0x14] sm:$0xf]
    %v86 = vld [vmem:[%s1 + $0x18] sm:$0xf]
    %v87 = vld [vmem:[%s1 + $0x1c] sm:$0xf]
    %v88 = vld [vmem:[%s1 + $0x20] sm:$0xf]
    %v89 = vld [vmem:[%s1 + $0x24] sm:$0xf]
    %v90 = vld [vmem:[%s1 + $0x28] sm:$0xf]
    %v91 = vld [vmem:[%s1 + $0x2c] sm:$0xf]
    %v92 = vld [vmem:[%s1 + $0x30] sm:$0xf]
    %v93 = vld [vmem:[%s1 + $0x34] sm:$0xf]
    %v94 = vld [vmem:[%s1 + $0x38] sm:$0xf]
    %v95 = vld [vmem:[%s1 + $0x3c] sm:$0xf]
    %v112 = vunpack.c.l.b16 %v80
    %v113 = vunpack.c.l.b16 %v81
    %v114 = vunpack.c.l.b16 %v82
    %v115 = vunpack.c.l.b16 %v83
    %v116 = vunpack.c.l.b16 %v84
    %v117 = vunpack.c.l.b16 %v85
    %v118 = vunpack.c.l.b16 %v86
    %v119 = vunpack.c.l.b16 %v87
    %v120 = vunpack.c.l.b16 %v88
    %v121 = vunpack.c.l.b16 %v89
    %v122 = vunpack.c.l.b16 %v90
    %v123 = vunpack.c.l.b16 %v91
    %v124 = vunpack.c.l.b16 %v92
    %v125 = vunpack.c.l.b16 %v93
    %v126 = vunpack.c.l.b16 %v94
    %v127 = vunpack.c.l.b16 %v95
    %v128 = vpack.c.b16 %v113, %v112
    %v129 = vpack.c.b16 %v115, %v114
    %v130 = vpack.c.b16 %v117, %v116
    %v131 = vpack.c.b16 %v119, %v118
    %v132 = vpack.c.b16 %v121, %v120
    %v133 = vpack.c.b16 %v123, %v122
    %v134 = vpack.c.b16 %v125, %v124
    %v135 = vpack.c.b16 %v127, %v126
    %v160 = vunpack.c.l.b16 %v48
    %v161 = vunpack.c.l.b16 %v49
    %v162 = vunpack.c.l.b16 %v50
    %v163 = vunpack.c.l.b16 %v51
    %v164 = vunpack.c.l.b16 %v52
    %v165 = vunpack.c.l.b16 %v53
    %v166 = vunpack.c.l.b16 %v54
    %v167 = vunpack.c.l.b16 %v55
    %v168 = vunpack.c.l.b16 %v56
    %v169 = vunpack.c.l.b16 %v57
    %v170 = vunpack.c.l.b16 %v58
    %v171 = vunpack.c.l.b16 %v59
    %v172 = vunpack.c.l.b16 %v60
    %v173 = vunpack.c.l.b16 %v61
    %v174 = vunpack.c.l.b16 %v62
    %v175 = vunpack.c.l.b16 %v63
    %v176 = vpack.c.b16 %v161, %v160
    %v177 = vpack.c.b16 %v163, %v162
    %v178 = vpack.c.b16 %v165, %v164
    %v179 = vpack.c.b16 %v167, %v166
    %v180 = vpack.c.b16 %v169, %v168
    %v181 = vpack.c.b16 %v171, %v170
    %v182 = vpack.c.b16 %v173, %v172
    %v183 = vpack.c.b16 %v175, %v174
    %192 = vmatprep.subr.bf16.mxu0 0
    %193 = vmatpush1.bf16.msra.mxu0 %v176
    %194 = vmatprep.subr.bf16.mxu0 0
    %195 = vmatpush1.bf16.msra.mxu0 %v177
    %196 = vmatprep.subr.bf16.mxu0 0
    %197 = vmatpush1.bf16.msra.mxu0 %v178
    %198 = vmatprep.subr.bf16.mxu0 0
    %199 = vmatpush1.bf16.msra.mxu0 %v179
    %200 = vmatprep.subr.bf16.mxu0 0
    %201 = vmatpush1.bf16.msra.mxu0 %v180
    %202 = vmatprep.subr.bf16.mxu0 0
    %203 = vmatpush1.bf16.msra.mxu0 %v181
    %204 = vmatprep.subr.bf16.mxu0 0
    %205 = vmatpush1.bf16.msra.mxu0 %v182
    %206 = vmatprep.subr.bf16.mxu0 0
    %207 = vmatpush1.bf16.msra.mxu0 %v183
    %208 = vmatprep.subr.bf16.mxu0 0
    %209 = vmatpush1.bf16.msra.mxu0 0
    %210 = vmatprep.subr.bf16.mxu0 0
    %211 = vmatpush1.bf16.msra.mxu0 0
    %212 = vmatprep.subr.bf16.mxu0 0
    %213 = vmatpush1.bf16.msra.mxu0 0
    %214 = vmatprep.subr.bf16.mxu0 0
    %215 = vmatpush1.bf16.msra.mxu0 0
    %216 = vmatprep.subr.bf16.mxu0 0
    %217 = vmatpush1.bf16.msra.mxu0 0
    %218 = vmatprep.subr.bf16.mxu0 0
    %219 = vmatpush1.bf16.msra.mxu0 0
    %220 = vmatprep.subr.bf16.mxu0 0
    %221 = vmatpush1.bf16.msra.mxu0 0
    %222 = vmatprep.subr.bf16.mxu0 0
    %223 = vmatpush1.bf16.msra.mxu0 0
    %224 = vmatprep.mubr.bf16.mxu0 0
    %225 = vmatmul.mubr.bf16.gmra.mrb[0].mxu0 %v128
    %v226 = vpop.f32.mrb[0].mxu0
    %v227 = vadd.f32 0.0, %v226
    %v228 = vpop.f32.mrb[0].mxu0
    %v229 = vpop.f32.mrb[0].mxu0
    %v230 = vadd.f32 0.0, %v229
    %v231 = vpop.f32.mrb[0].mxu0
    %232 = vmatprep.mubr.bf16.mxu0 0
    %233 = vmatmul.mubr.bf16.gmra.mrb[0].mxu0 %v129
    %v234 = vpop.f32.mrb[0].mxu0
    %v235 = vadd.f32 0.0, %v234
    %v236 = vpop.f32.mrb[0].mxu0
    %v237 = vpop.f32.mrb[0].mxu0
    %v238 = vadd.f32 0.0, %v237
    %v239 = vpop.f32.mrb[0].mxu0
    %240 = vmatprep.mubr.bf16.mxu0 0
    %241 = vmatmul.mubr.bf16.gmra.mrb[0].mxu0 %v130
    %v242 = vpop.f32.mrb[0].mxu0
    %v243 = vadd.f32 0.0, %v242
    %v244 = vpop.f32.mrb[0].mxu0
    %v245 = vpop.f32.mrb[0].mxu0
    %v246 = vadd.f32 0.0, %v245
    %v247 = vpop.f32.mrb[0].mxu0
    %248 = vmatprep.mubr.bf16.mxu0 0
    %249 = vmatmul.mubr.bf16.gmra.mrb[0].mxu0 %v131
    %v250 = vpop.f32.mrb[0].mxu0
    %v251 = vadd.f32 0.0, %v250
    %v252 = vpop.f32.mrb[0].mxu0
    %v253 = vpop.f32.mrb[0].mxu0
    %v254 = vadd.f32 0.0, %v253
    %v255 = vpop.f32.mrb[0].mxu0
    %256 = vmatprep.mubr.bf16.mxu0 0
    %257 = vmatmul.mubr.bf16.gmra.mrb[0].mxu0 %v132
    %v258 = vpop.f32.mrb[0].mxu0
    %v259 = vadd.f32 0.0, %v258
    %v260 = vpop.f32.mrb[0].mxu0
    %v261 = vpop.f32.mrb[0].mxu0
    %v262 = vadd.f32 0.0, %v261
    %v263 = vpop.f32.mrb[0].mxu0
    %264 = vmatprep.mubr.bf16.mxu0 0
    %265 = vmatmul.mubr.bf16.gmra.mrb[0].mxu0 %v133
    %v266 = vpop.f32.mrb[0].mxu0
    %v267 = vadd.f32 0.0, %v266
    %v268 = vpop.f32.mrb[0].mxu0
    %v269 = vpop.f32.mrb[0].mxu0
    %v270 = vadd.f32 0.0, %v269
    %v271 = vpop.f32.mrb[0].mxu0
    %272 = vmatprep.mubr.bf16.mxu0 0
    %273 = vmatmul.mubr.bf16.gmra.mrb[0].mxu0 %v134
    %v274 = vpop.f32.mrb[0].mxu0
    %v275 = vadd.f32 0.0, %v274
    %v276 = vpop.f32.mrb[0].mxu0
    %v277 = vpop.f32.mrb[0].mxu0
    %v278 = vadd.f32 0.0, %v277
    %v279 = vpop.f32.mrb[0].mxu0
    %280 = vmatprep.mubr.bf16.mxu0 0
    %281 = vmatmul.mubr.bf16.gmra.mrb[0].mxu0 %v135
    %v282 = vpop.f32.mrb[0].mxu0
    %v283 = vadd.f32 0.0, %v282
    %v284 = vpop.f32.mrb[0].mxu0
    %v285 = vpop.f32.mrb[0].mxu0
    %v286 = vadd.f32 0.0, %v285
    %v287 = vpop.f32.mrb[0].mxu0
    %288 = vdwg.mxu0
    %v289 = vadd.f32 %v64, %v227
    %v290 = vadd.f32 %v65, %v230
    %v291 = vadd.f32 %v66, %v235
    %v292 = vadd.f32 %v67, %v238
    %v293 = vadd.f32 %v68, %v243
    %v294 = vadd.f32 %v69, %v246
    %v295 = vadd.f32 %v70, %v251
    %v296 = vadd.f32 %v71, %v254
    %v297 = vadd.f32 %v72, %v259
    %v298 = vadd.f32 %v73, %v262
    %v299 = vadd.f32 %v74, %v267
    %v300 = vadd.f32 %v75, %v270
    %v301 = vadd.f32 %v76, %v275
    %v302 = vadd.f32 %v77, %v278
    %v303 = vadd.f32 %v78, %v283
    %v304 = vadd.f32 %v79, %v286
    %305 = vst [vmem:[%s4] sm:$0xff] %v289
    %306 = vst [vmem:[%s4 + $0x8] sm:$0xff] %v290
    %307 = vst [vmem:[%s4 + $0x10] sm:$0xff] %v291
    %308 = vst [vmem:[%s4 + $0x18] sm:$0xff] %v292
    %309 = vst [vmem:[%s4 + $0x20] sm:$0xff] %v293
    %310 = vst [vmem:[%s4 + $0x28] sm:$0xff] %v294
    %311 = vst [vmem:[%s4 + $0x30] sm:$0xff] %v295
    %312 = vst [vmem:[%s4 + $0x38] sm:$0xff] %v296
    %313 = vst [vmem:[%s4 + $0x40] sm:$0xff] %v297
    %314 = vst [vmem:[%s4 + $0x48] sm:$0xff] %v298
    %315 = vst [vmem:[%s4 + $0x50] sm:$0xff] %v299
    %316 = vst [vmem:[%s4 + $0x58] sm:$0xff] %v300
    %317 = vst [vmem:[%s4 + $0x60] sm:$0xff] %v301
    %318 = vst [vmem:[%s4 + $0x68] sm:$0xff] %v302
    %319 = vst [vmem:[%s4 + $0x70] sm:$0xff] %v303
    %320 = vst [vmem:[%s4 + $0x78] sm:$0xff] %v304
  $region21: #{gcn_generator.7} parent=0 // pred_fallthru
    _
  // Predicated region
  $region22: #{gcn_generator.7} parent=0 // pred_check
    %p321 = pneg %p17
  $region23: #{gcn_generator.7} parent=0 // pred_check_branch
    %323 = sbr.rel (%p321) target = $region25
  $region24: #{gcn_generator.7} parent=0 // pred_region
    %v324 = vld [vmem:[%s4] sm:$0xff]
    %v325 = vld [vmem:[%s4 + $0x8] sm:$0xff]
    %v326 = vld [vmem:[%s4 + $0x10] sm:$0xff]
    %v327 = vld [vmem:[%s4 + $0x18] sm:$0xff]
    %v328 = vld [vmem:[%s4 + $0x20] sm:$0xff]
    %v329 = vld [vmem:[%s4 + $0x28] sm:$0xff]
    %v330 = vld [vmem:[%s4 + $0x30] sm:$0xff]
    %v331 = vld [vmem:[%s4 + $0x38] sm:$0xff]
    %v332 = vld [vmem:[%s4 + $0x40] sm:$0xff]
    %v333 = vld [vmem:[%s4 + $0x48] sm:$0xff]
    %v334 = vld [vmem:[%s4 + $0x50] sm:$0xff]
    %v335 = vld [vmem:[%s4 + $0x58] sm:$0xff]
    %v336 = vld [vmem:[%s4 + $0x60] sm:$0xff]
    %v337 = vld [vmem:[%s4 + $0x68] sm:$0xff]
    %v338 = vld [vmem:[%s4 + $0x70] sm:$0xff]
    %v339 = vld [vmem:[%s4 + $0x78] sm:$0xff]
    %v340 = vld [vmem:[%s3] sm:$0x1]
    %v342 = vlaneseq
    %v343 = vshrl.u32 %v342, 7
    %v344 = vsub.s32 0, %v343
    %v345 = vrot.slane %v340, %v344
    %v347 = vadd.f32 %v324, %v345
    %v348 = vadd.f32 %v325, %v345
    %v349 = vadd.f32 %v326, %v345
    %v350 = vadd.f32 %v327, %v345
    %v351 = vadd.f32 %v328, %v345
    %v352 = vadd.f32 %v329, %v345
    %v353 = vadd.f32 %v330, %v345
    %v354 = vadd.f32 %v331, %v345
    %v355 = vadd.f32 %v332, %v345
    %v356 = vadd.f32 %v333, %v345
    %v357 = vadd.f32 %v334, %v345
    %v358 = vadd.f32 %v335, %v345
    %v359 = vadd.f32 %v336, %v345
    %v360 = vadd.f32 %v337, %v345
    %v361 = vadd.f32 %v338, %v345
    %v362 = vadd.f32 %v339, %v345
    %363 = vst [vmem:[%s4] sm:$0xff] %v347
    %364 = vst [vmem:[%s4 + $0x8] sm:$0xff] %v348
    %365 = vst [vmem:[%s4 + $0x10] sm:$0xff] %v349
    %366 = vst [vmem:[%s4 + $0x18] sm:$0xff] %v350
    %367 = vst [vmem:[%s4 + $0x20] sm:$0xff] %v351
    %368 = vst [vmem:[%s4 + $0x28] sm:$0xff] %v352
    %369 = vst [vmem:[%s4 + $0x30] sm:$0xff] %v353
    %370 = vst [vmem:[%s4 + $0x38] sm:$0xff] %v354
    %371 = vst [vmem:[%s4 + $0x40] sm:$0xff] %v355
    %372 = vst [vmem:[%s4 + $0x48] sm:$0xff] %v356
    %373 = vst [vmem:[%s4 + $0x50] sm:$0xff] %v357
    %374 = vst [vmem:[%s4 + $0x58] sm:$0xff] %v358
    %375 = vst [vmem:[%s4 + $0x60] sm:$0xff] %v359
    %376 = vst [vmem:[%s4 + $0x68] sm:$0xff] %v360
    %377 = vst [vmem:[%s4 + $0x70] sm:$0xff] %v361
    %378 = vst [vmem:[%s4 + $0x78] sm:$0xff] %v362
  $region25: #{gcn_generator.7} parent=0 // pred_fallthru
    _
  // Predicated region
  $region26: #{gcn_generator.7} parent=0 // pred_check
    _
  $region27: #{gcn_generator.7} parent=0 // pred_check_branch
    %380 = sbr.rel (0) target = $region29
  $region28: #{gcn_generator.7} parent=0 // pred_region
    _
  $region29: #{gcn_generator.7} parent=0 // pred_fallthru
    _
  // Predicated region
  $region30: #{gcn_generator.7} parent=0 // pred_check
    _
  $region31: #{gcn_generator.7} parent=0 // pred_check_branch
    %382 = sbr.rel (0) target = $region33
  $region32: #{gcn_generator.7} parent=0 // pred_region
    _
  $region33: #{gcn_generator.7} parent=0 // pred_fallthru
    _

</llo_original>
